<compile_context>
chip_gen: v5e
topology: v5e:2x2
jax: 0.10.0
libtpu: 0.0.40
codegen_flags: <defaults>
</compile_context>

<pallas_src>
import jax
import jax.numpy as jnp
from jax.experimental import pallas as pl
from jax.experimental.pallas import tpu as pltpu

_LANES = 128   # TPU lane width (last-dim tile)
_GUARD = 8     # sublane-aligned column guard on each side of the scratch interior


def dwconv_kernel(x_ref, w_ref, b_ref, o_ref, xpad_ref):
    # x_ref   : (H, W, TC)         unpadded input tile (one batch elem, one C tile)
    # w_ref   : (3, 3, TC)         depthwise 3x3 taps (per channel)
    # b_ref   : (1, TC)            bias
    # o_ref   : (H, W, TC)         output tile
    # xpad_ref: (H+2, W+2G, TC)    VMEM scratch; interior at rows 1..H, cols G..G+W-1
    H, W, TC = o_ref.shape
    G = (xpad_ref.shape[1] - W) // 2
    dt = xpad_ref.dtype

    # Build the zero halo in VMEM.  Redone every grid step: the scratch persists
    # across steps and, under megacore sharding, program_id == 0 may never run on
    # a given core, so a one-time init would be unsafe.  Cost is 2 rows + 2 thin
    # column blocks -- negligible.
    zero_rows = jnp.zeros((1, W + 2 * G, TC), dt)
    zero_cols = jnp.zeros((H + 2, G, TC), dt)
    xpad_ref[0:1, :, :] = zero_rows
    xpad_ref[H + 1:H + 2, :, :] = zero_rows
    xpad_ref[:, 0:G, :] = zero_cols
    xpad_ref[:, G + W:2 * G + W, :] = zero_cols
    # Copy the unpadded block into the sublane-aligned interior (column offset G = 8).
    xpad_ref[1:H + 1, G:G + W, :] = x_ref[...]

    w = w_ref[...].astype(jnp.float32)      # (3, 3, TC)
    b = b_ref[...].astype(jnp.float32)      # (1, TC)

    # Load each column-shifted plane once (dx = -1, 0, +1) and reuse it across all
    # three dy taps below via leading-dim slices (no per-tap sublane-shifted reload).
    planes = [
        xpad_ref[:, (G - 1) + dx:(G - 1) + dx + W, :].astype(jnp.float32)  # (H+2, W, TC)
        for dx in range(3)
    ]

    # f32 accumulator, initialized with the broadcast bias (saves a final add pass).
    acc = jnp.broadcast_to(b[0, :][None, None, :], (H, W, TC))
    for dy in range(3):
        for dx in range(3):
            acc = acc + planes[dx][dy:dy + H] * w[dy, dx, :][None, None, :]
    o_ref[...] = acc.astype(o_ref.dtype)


def _pick_c_tile(hw, c_padded, itemsize):
    """Largest multiple-of-128 channel tile dividing c_padded whose per-step VMEM
    footprint (double-buffered in/out blocks, padded scratch, f32 temporaries)
    stays inside a conservative ~16 MiB budget (fits v5e/v6e/v7x scoped VMEM)."""
    groups = c_padded // _LANES
    per_group = hw * _LANES * (5 * itemsize + 5 * 4)   # rough bytes per 128-lane group
    max_groups = max(1, (16 * 1024 * 1024) // per_group)
    for g in range(int(min(groups, max_groups)), 0, -1):
        if groups % g == 0:
            return g * _LANES
    return _LANES


def dwconv_pallas(x, H, W, weight, bias):
    """x: (B, N, C) with N == H*W; weight: (3, 3, C); bias: (1, C).

    Works for bf16 I/O as well (accumulation stays f32); the demo uses f32.
    """
    B, N, C = x.shape
    assert N == H * W

    # Pad channels up to a multiple of 128 so the lane axis is dense (unmasked vst).
    Cp = ((C + _LANES - 1) // _LANES) * _LANES
    if Cp != C:
        x = jnp.pad(x, ((0, 0), (0, 0), (0, Cp - C)))
        weight = jnp.pad(weight, ((0, 0), (0, 0), (0, Cp - C)))
        bias = jnp.pad(bias, ((0, 0), (0, Cp - C)))
    x_img = x.reshape(B, H, W, Cp)   # free reshape; NO spatial padding in HBM

    TC = _pick_c_tile(H * W, Cp, x_img.dtype.itemsize)
    grid = (B, Cp // TC)

    out = pl.pallas_call(
        dwconv_kernel,
        out_shape=jax.ShapeDtypeStruct((B, H, W, Cp), x.dtype),
        grid_spec=pltpu.PrefetchScalarGridSpec(
            num_scalar_prefetch=0,
            grid=grid,
            in_specs=[
                pl.BlockSpec((pl.Squeezed(), H, W, TC), lambda b, c: (b, 0, 0, c)),
                pl.BlockSpec((3, 3, TC), lambda b, c: (0, 0, c)),
                pl.BlockSpec((1, TC), lambda b, c: (0, c)),
            ],
            out_specs=pl.BlockSpec((pl.Squeezed(), H, W, TC),
                                   lambda b, c: (b, 0, 0, c)),
            scratch_shapes=[pltpu.VMEM((H + 2, W + 2 * _GUARD, TC), x.dtype)],
        ),
        compiler_params=pltpu.CompilerParams(
            dimension_semantics=("parallel", "parallel"),
            vmem_limit_bytes=32 * 1024 * 1024,
        ),
    )(x_img, weight, bias)

    out = out.reshape(B, N, Cp)
    if Cp != C:
        out = out[:, :, :C]
    return out


def dwconv_reference(x, H, W, weight, bias):
    """Pure-JAX reference matching PyTorch nn.Conv2d(C, C, 3, 1, 1, groups=C)."""
    B, N, C = x.shape
    xi = jnp.transpose(x.reshape(B, H, W, C), (0, 3, 1, 2))          # NCHW
    w = jnp.transpose(weight, (2, 0, 1))[:, None, :, :]              # (C,1,3,3) OIHW
    out = jax.lax.conv_general_dilated(
        xi, w, window_strides=(1, 1), padding=((1, 1), (1, 1)),
        dimension_numbers=("NCHW", "OIHW", "NCHW"),
        feature_group_count=C)
    out = out + bias.reshape(1, C, 1, 1)
    return jnp.transpose(out.reshape(B, C, N), (0, 2, 1))


if __name__ == "__main__":
    # Small shapes consistent with DWConv.forward: x (B, N, C), N = H*W.
    B, C, Hh, Ww = 2, 4, 16, 16
    N = Hh * Ww

    key = jax.random.PRNGKey(0)
    kx, kw, kb = jax.random.split(key, 3)

    x = jax.random.normal(kx, (B, N, C), dtype=jnp.float32)
    # Deterministic parameter init (depthwise conv: per-channel 3x3 kernel + bias).
    weight = 0.1 * jax.random.normal(kw, (3, 3, C), dtype=jnp.float32)
    bias = 0.1 * jax.random.normal(kb, (1, C), dtype=jnp.float32)

    out = dwconv_pallas(x, Hh, Ww, weight, bias)
    out = jax.block_until_ready(out)

    ref = dwconv_reference(x, Hh, Ww, weight, bias)
    assert out.shape == (B, N, C)
    assert jnp.allclose(out, ref, atol=1e-5, rtol=1e-5)

    print("KERNEL_OK")
</pallas_src>

<mosaic_0001>
module attributes {stable_mosaic.version = 11 : i64} {
  func.func @dwconv_kernel(%arg0: i32, %arg1: i32, %arg2: memref<1x16x16x128xf32, #tpu.memory_space<vmem>>, %arg3: memref<3x3x128xf32, #tpu.memory_space<vmem>>, %arg4: memref<1x128xf32, #tpu.memory_space<vmem>>, %arg5: memref<1x16x16x128xf32, #tpu.memory_space<vmem>>, %arg6: memref<18x32x128xf32, #tpu.memory_space<vmem>>) attributes {dimension_semantics = [#tpu.dimension_semantics<parallel>, #tpu.dimension_semantics<parallel>], iteration_bounds = array<i64: 2, 1>, scalar_prefetch = 0 : i64, scratch_operands = 1 : i64, tpu.core_type = #tpu.core_type<tc>, window_params = [{transform_indices = @transform_0, window_bounds = array<i64: 1, 16, 16, 128>}, {transform_indices = @transform_1, window_bounds = array<i64: 3, 3, 128>}, {transform_indices = @transform_2, window_bounds = array<i64: 1, 128>}, {transform_indices = @transform_3, window_bounds = array<i64: 1, 16, 16, 128>}]} {
    %cst = arith.constant 0.000000e+00 : f32
    %0 = vector.broadcast %cst : f32 to vector<1x32x128xf32>
    %cst_0 = arith.constant 0.000000e+00 : f32
    %1 = vector.broadcast %cst_0 : f32 to vector<18x8x128xf32>
    %c0 = arith.constant 0 : index
    %c0_1 = arith.constant 0 : index
    %c0_2 = arith.constant 0 : index
    %2 = vector.load %arg6[%c0, %c0_1, %c0_2] : memref<18x32x128xf32, #tpu.memory_space<vmem>>, vector<1x32x128xf32>
    tpu.vector_store %arg6[%c0, %c0_1, %c0_2], %0 {strides = array<i32>} : memref<18x32x128xf32, #tpu.memory_space<vmem>>, vector<1x32x128xf32>,
    %c17 = arith.constant 17 : index
    %c0_3 = arith.constant 0 : index
    %c0_4 = arith.constant 0 : index
    %3 = vector.load %arg6[%c17, %c0_3, %c0_4] : memref<18x32x128xf32, #tpu.memory_space<vmem>>, vector<1x32x128xf32>
    tpu.vector_store %arg6[%c17, %c0_3, %c0_4], %0 {strides = array<i32>} : memref<18x32x128xf32, #tpu.memory_space<vmem>>, vector<1x32x128xf32>,
    %c0_5 = arith.constant 0 : index
    %c0_6 = arith.constant 0 : index
    %c0_7 = arith.constant 0 : index
    %4 = vector.load %arg6[%c0_5, %c0_6, %c0_7] : memref<18x32x128xf32, #tpu.memory_space<vmem>>, vector<18x8x128xf32>
    tpu.vector_store %arg6[%c0_5, %c0_6, %c0_7], %1 {strides = array<i32>} : memref<18x32x128xf32, #tpu.memory_space<vmem>>, vector<18x8x128xf32>,
    %c0_8 = arith.constant 0 : index
    %c24 = arith.constant 24 : index
    %c0_9 = arith.constant 0 : index
    %5 = vector.load %arg6[%c0_8, %c24, %c0_9] : memref<18x32x128xf32, #tpu.memory_space<vmem>>, vector<18x8x128xf32>
    tpu.vector_store %arg6[%c0_8, %c24, %c0_9], %1 {strides = array<i32>} : memref<18x32x128xf32, #tpu.memory_space<vmem>>, vector<18x8x128xf32>,
    %c0_10 = arith.constant 0 : index
    %c0_11 = arith.constant 0 : index
    %c0_12 = arith.constant 0 : index
    %c0_13 = arith.constant 0 : index
    %6 = vector.load %arg2[%c0_10, %c0_11, %c0_12, %c0_13] : memref<1x16x16x128xf32, #tpu.memory_space<vmem>>, vector<1x16x16x128xf32>
    %7 = vector.shape_cast %6 : vector<1x16x16x128xf32> to vector<16x16x128xf32>
    %c1 = arith.constant 1 : index
    %c8 = arith.constant 8 : index
    %c0_14 = arith.constant 0 : index
    %8 = vector.load %arg6[%c1, %c8, %c0_14] : memref<18x32x128xf32, #tpu.memory_space<vmem>>, vector<16x16x128xf32>
    tpu.vector_store %arg6[%c1, %c8, %c0_14], %7 {strides = array<i32>} : memref<18x32x128xf32, #tpu.memory_space<vmem>>, vector<16x16x128xf32>,
    %c0_15 = arith.constant 0 : index
    %c0_16 = arith.constant 0 : index
    %c0_17 = arith.constant 0 : index
    %9 = vector.load %arg3[%c0_15, %c0_16, %c0_17] : memref<3x3x128xf32, #tpu.memory_space<vmem>>, vector<3x3x128xf32>
    %c0_18 = arith.constant 0 : index
    %c0_19 = arith.constant 0 : index
    %10 = vector.load %arg4[%c0_18, %c0_19] : memref<1x128xf32, #tpu.memory_space<vmem>>, vector<1x128xf32>
    %c0_20 = arith.constant 0 : index
    %c7 = arith.constant 7 : index
    %c0_21 = arith.constant 0 : index
    %11 = vector.load %arg6[%c0_20, %c7, %c0_21] : memref<18x32x128xf32, #tpu.memory_space<vmem>>, vector<18x16x128xf32>
    %c0_22 = arith.constant 0 : index
    %c8_23 = arith.constant 8 : index
    %c0_24 = arith.constant 0 : index
    %12 = vector.load %arg6[%c0_22, %c8_23, %c0_24] : memref<18x32x128xf32, #tpu.memory_space<vmem>>, vector<18x16x128xf32>
    %c0_25 = arith.constant 0 : index
    %c9 = arith.constant 9 : index
    %c0_26 = arith.constant 0 : index
    %13 = vector.load %arg6[%c0_25, %c9, %c0_26] : memref<18x32x128xf32, #tpu.memory_space<vmem>>, vector<18x16x128xf32>
    %14 = vector.shape_cast %10 : vector<1x128xf32> to vector<128xf32>
    %15 = vector.shape_cast %14 : vector<128xf32> to vector<1x1x128xf32>
    %16 = vector.shape_cast %15 : vector<1x1x128xf32> to vector<1x1x128xf32>
    %17 = vector.broadcast %16 : vector<1x1x128xf32> to vector<16x16x128xf32>
    %18 = vector.extract_strided_slice %11 {offsets = [0, 0, 0], sizes = [16, 16, 128], strides = [1, 1, 1]} : vector<18x16x128xf32> to vector<16x16x128xf32>
    %19 = vector.extract_strided_slice %9 {offsets = [0, 0, 0], sizes = [1, 1, 128], strides = [1, 1, 1]} : vector<3x3x128xf32> to vector<1x1x128xf32>
    %20 = vector.shape_cast %19 : vector<1x1x128xf32> to vector<128xf32>
    %21 = vector.shape_cast %20 : vector<128xf32> to vector<1x1x128xf32>
    %22 = vector.broadcast %21 : vector<1x1x128xf32> to vector<16x16x128xf32>
    %23 = arith.mulf %18, %22 : vector<16x16x128xf32>
    %24 = arith.addf %17, %23 : vector<16x16x128xf32>
    %25 = vector.extract_strided_slice %12 {offsets = [0, 0, 0], sizes = [16, 16, 128], strides = [1, 1, 1]} : vector<18x16x128xf32> to vector<16x16x128xf32>
    %26 = vector.extract_strided_slice %9 {offsets = [0, 1, 0], sizes = [1, 1, 128], strides = [1, 1, 1]} : vector<3x3x128xf32> to vector<1x1x128xf32>
    %27 = vector.shape_cast %26 : vector<1x1x128xf32> to vector<128xf32>
    %28 = vector.shape_cast %27 : vector<128xf32> to vector<1x1x128xf32>
    %29 = vector.broadcast %28 : vector<1x1x128xf32> to vector<16x16x128xf32>
    %30 = arith.mulf %25, %29 : vector<16x16x128xf32>
    %31 = arith.addf %24, %30 : vector<16x16x128xf32>
    %32 = vector.extract_strided_slice %13 {offsets = [0, 0, 0], sizes = [16, 16, 128], strides = [1, 1, 1]} : vector<18x16x128xf32> to vector<16x16x128xf32>
    %33 = vector.extract_strided_slice %9 {offsets = [0, 2, 0], sizes = [1, 1, 128], strides = [1, 1, 1]} : vector<3x3x128xf32> to vector<1x1x128xf32>
    %34 = vector.shape_cast %33 : vector<1x1x128xf32> to vector<128xf32>
    %35 = vector.shape_cast %34 : vector<128xf32> to vector<1x1x128xf32>
    %36 = vector.broadcast %35 : vector<1x1x128xf32> to vector<16x16x128xf32>
    %37 = arith.mulf %32, %36 : vector<16x16x128xf32>
    %38 = arith.addf %31, %37 : vector<16x16x128xf32>
    %39 = vector.extract_strided_slice %11 {offsets = [1, 0, 0], sizes = [16, 16, 128], strides = [1, 1, 1]} : vector<18x16x128xf32> to vector<16x16x128xf32>
    %40 = vector.extract_strided_slice %9 {offsets = [1, 0, 0], sizes = [1, 1, 128], strides = [1, 1, 1]} : vector<3x3x128xf32> to vector<1x1x128xf32>
    %41 = vector.shape_cast %40 : vector<1x1x128xf32> to vector<128xf32>
    %42 = vector.shape_cast %41 : vector<128xf32> to vector<1x1x128xf32>
    %43 = vector.broadcast %42 : vector<1x1x128xf32> to vector<16x16x128xf32>
    %44 = arith.mulf %39, %43 : vector<16x16x128xf32>
    %45 = arith.addf %38, %44 : vector<16x16x128xf32>
    %46 = vector.extract_strided_slice %12 {offsets = [1, 0, 0], sizes = [16, 16, 128], strides = [1, 1, 1]} : vector<18x16x128xf32> to vector<16x16x128xf32>
    %47 = vector.extract_strided_slice %9 {offsets = [1, 1, 0], sizes = [1, 1, 128], strides = [1, 1, 1]} : vector<3x3x128xf32> to vector<1x1x128xf32>
    %48 = vector.shape_cast %47 : vector<1x1x128xf32> to vector<128xf32>
    %49 = vector.shape_cast %48 : vector<128xf32> to vector<1x1x128xf32>
    %50 = vector.broadcast %49 : vector<1x1x128xf32> to vector<16x16x128xf32>
    %51 = arith.mulf %46, %50 : vector<16x16x128xf32>
    %52 = arith.addf %45, %51 : vector<16x16x128xf32>
    %53 = vector.extract_strided_slice %13 {offsets = [1, 0, 0], sizes = [16, 16, 128], strides = [1, 1, 1]} : vector<18x16x128xf32> to vector<16x16x128xf32>
    %54 = vector.extract_strided_slice %9 {offsets = [1, 2, 0], sizes = [1, 1, 128], strides = [1, 1, 1]} : vector<3x3x128xf32> to vector<1x1x128xf32>
    %55 = vector.shape_cast %54 : vector<1x1x128xf32> to vector<128xf32>
    %56 = vector.shape_cast %55 : vector<128xf32> to vector<1x1x128xf32>
    %57 = vector.broadcast %56 : vector<1x1x128xf32> to vector<16x16x128xf32>
    %58 = arith.mulf %53, %57 : vector<16x16x128xf32>
    %59 = arith.addf %52, %58 : vector<16x16x128xf32>
    %60 = vector.extract_strided_slice %11 {offsets = [2, 0, 0], sizes = [16, 16, 128], strides = [1, 1, 1]} : vector<18x16x128xf32> to vector<16x16x128xf32>
    %61 = vector.extract_strided_slice %9 {offsets = [2, 0, 0], sizes = [1, 1, 128], strides = [1, 1, 1]} : vector<3x3x128xf32> to vector<1x1x128xf32>
    %62 = vector.shape_cast %61 : vector<1x1x128xf32> to vector<128xf32>
    %63 = vector.shape_cast %62 : vector<128xf32> to vector<1x1x128xf32>
    %64 = vector.broadcast %63 : vector<1x1x128xf32> to vector<16x16x128xf32>
    %65 = arith.mulf %60, %64 : vector<16x16x128xf32>
    %66 = arith.addf %59, %65 : vector<16x16x128xf32>
    %67 = vector.extract_strided_slice %12 {offsets = [2, 0, 0], sizes = [16, 16, 128], strides = [1, 1, 1]} : vector<18x16x128xf32> to vector<16x16x128xf32>
    %68 = vector.extract_strided_slice %9 {offsets = [2, 1, 0], sizes = [1, 1, 128], strides = [1, 1, 1]} : vector<3x3x128xf32> to vector<1x1x128xf32>
    %69 = vector.shape_cast %68 : vector<1x1x128xf32> to vector<128xf32>
    %70 = vector.shape_cast %69 : vector<128xf32> to vector<1x1x128xf32>
    %71 = vector.broadcast %70 : vector<1x1x128xf32> to vector<16x16x128xf32>
    %72 = arith.mulf %67, %71 : vector<16x16x128xf32>
    %73 = arith.addf %66, %72 : vector<16x16x128xf32>
    %74 = vector.extract_strided_slice %13 {offsets = [2, 0, 0], sizes = [16, 16, 128], strides = [1, 1, 1]} : vector<18x16x128xf32> to vector<16x16x128xf32>
    %75 = vector.extract_strided_slice %9 {offsets = [2, 2, 0], sizes = [1, 1, 128], strides = [1, 1, 1]} : vector<3x3x128xf32> to vector<1x1x128xf32>
    %76 = vector.shape_cast %75 : vector<1x1x128xf32> to vector<128xf32>
    %77 = vector.shape_cast %76 : vector<128xf32> to vector<1x1x128xf32>
    %78 = vector.broadcast %77 : vector<1x1x128xf32> to vector<16x16x128xf32>
    %79 = arith.mulf %74, %78 : vector<16x16x128xf32>
    %80 = arith.addf %73, %79 : vector<16x16x128xf32>
    %c0_27 = arith.constant 0 : index
    %c0_28 = arith.constant 0 : index
    %c0_29 = arith.constant 0 : index
    %c0_30 = arith.constant 0 : index
    %81 = vector.load %arg5[%c0_27, %c0_28, %c0_29, %c0_30] : memref<1x16x16x128xf32, #tpu.memory_space<vmem>>, vector<1x16x16x128xf32>
    %82 = vector.shape_cast %81 : vector<1x16x16x128xf32> to vector<16x16x128xf32>
    %83 = vector.shape_cast %80 : vector<16x16x128xf32> to vector<1x16x16x128xf32>
    tpu.vector_store %arg5[%c0_27, %c0_28, %c0_29, %c0_30], %83 {strides = array<i32>} : memref<1x16x16x128xf32, #tpu.memory_space<vmem>>, vector<1x16x16x128xf32>,
    return
  }
  func.func @transform_0(%arg0: i32, %arg1: i32) -> (i32, i32, i32, i32) {
    %c0_i32 = arith.constant 0 : i32
    %c0_i32_0 = arith.constant 0 : i32
    %c0_i32_1 = arith.constant 0 : i32
    return %arg0, %c0_i32, %c0_i32_0, %arg1 : i32, i32, i32, i32
  }
  func.func @transform_1(%arg0: i32, %arg1: i32) -> (i32, i32, i32) {
    %c0_i32 = arith.constant 0 : i32
    %c0_i32_0 = arith.constant 0 : i32
    %c0_i32_1 = arith.constant 0 : i32
    return %c0_i32, %c0_i32_0, %arg1 : i32, i32, i32
  }
  func.func @transform_2(%arg0: i32, %arg1: i32) -> (i32, i32) {
    %c0_i32 = arith.constant 0 : i32
    %c0_i32_0 = arith.constant 0 : i32
    return %c0_i32, %arg1 : i32, i32
  }
  func.func @transform_3(%arg0: i32, %arg1: i32) -> (i32, i32, i32, i32) {
    %c0_i32 = arith.constant 0 : i32
    %c0_i32_0 = arith.constant 0 : i32
    %c0_i32_1 = arith.constant 0 : i32
    return %arg0, %c0_i32, %c0_i32_0, %arg1 : i32, i32, i32, i32
  }
}

</mosaic_0001>

<llo_original>
// kernel: tpu_custom_call.1
$region0: #{tpu_custom_call.1}
  #allocation0 [shape = 'u32[]', space=smem, size = 0x4, offset = 0x4, fixed_abs, tag = 'smem constant byte address 0x4 - core index']
  #allocation1 [shape = 'u32[72,128]{1,0:T(1,128)}', space=vmem, size = 0x9000, scoped, tag = 'internal scratch']
  #allocation2 [shape = 'f32[18,32,128]{2,1,0:T(8,128)}', space=vmem, size = 0x48000, scoped, tag = 'scratch operand']
  %s0 = inlined_call_operand.hbm [shape: f32[2,16,16,128], index: 0, kind: input, shape index: {}]
  %s1 = inlined_call_operand.hbm [shape: f32[3,3,128], index: 1, kind: input, shape index: {}]
  %s2 = inlined_call_operand.vmem [shape: f32[1,128], index: 2, kind: input, shape index: {}]
  %s3 = inlined_call_operand.hbm [shape: f32[2,16,16,128], index: 3, kind: output, shape index: {}]
  %s4 = sld [smem:[#allocation0]]
  $region53: #{tpu_custom_call.1} parent=0
    _
  %s6 = ssub.s32 1, %s4
  %s7 = scalar_select 0, %s6, %s4
  $region1: #{tpu_custom_call.1} parent=0
    #allocation3 [shape = 'u8[262144]{0}', space=vmem, size = 0x40000, scoped, tag = 'input window, operand 0']
    #allocation4 [shape = 's32[2]{0}', space=sflag, size = 0x8, scoped, tag = 'scoped memory for tpu_custom_call.1']
    #allocation5 [shape = 's32[2]{0}', space=sflag, size = 0x8, scoped, tag = 'scoped memory for tpu_custom_call.1']
    #allocation6 [shape = 'u8[6144]{0}', space=vmem, size = 0x1800, scoped, tag = 'input window, operand 1, single buffered']
    #allocation7 [shape = 's32[1]{0}', space=sflag, size = 0x4, scoped, tag = 'scoped memory for tpu_custom_call.1']
    #allocation8 [shape = 'u8[262144]{0}', space=vmem, size = 0x40000, scoped, tag = 'output window, operand 0']
    %8 = vsyncpa [#allocation4], 0
    %s9 = scalar_lea.sflag [#allocation4], 1
    %10 = vsyncpa %s9, 0
    %11 = vsyncpa [#allocation7], 0
    %12 = vsyncpa [#allocation5], 0
    %s13 = scalar_lea.sflag [#allocation5], 1
    %14 = vsyncpa %s13, 0
    loop: start=0, step=1, limit=4
    $region2: #{tpu_custom_call.1} parent=1 // loop_pre_header
      _
    $region3: #{tpu_custom_call.1} parent=1 // loop_header
      %s16 = sphi 0, %s20
      %p17 = scmp.ge.s32.totalorder %s16, 4
      %s23 = sphi 0, %s35
      %s24 = sphi 0, %s31
      %s25 = sphi 0, %s23
      %s26 = sphi 0, %s24
      %s27 = sphi 0, %s25
      %s28 = sphi 0, %s26
      %s40 = sphi 0, %s42
      %s43 = sphi 0, %s40
      %s44 = sphi 0, %s43
      %s60 = sphi 0, %s44
      %s66 = sphi 0, %s68
      %s69 = sphi 0, %s66
      %s70 = sphi 0, %s69
      %s86 = sphi 0, %s70
      %s92 = sphi 0, %s94
      %s95 = sphi 0, %s92
      %s96 = sphi 0, %s95
      %s112 = sphi 0, %s96
      %s120 = sphi 0, %s122
      %s123 = sphi 0, %s120
      %s124 = sphi 0, %s123
      %s140 = sphi 0, %s124
    $region4: #{tpu_custom_call.1} parent=1 // loop_header_branch
      %19 = sbr.rel (%p17) target = $region8
    $region5: #{tpu_custom_call.1} parent=1 // loop_body
      %s21 = ssub.s32 %s16, 1
      %s22 = ssub.s32 %s16, 2
      %s29 = sadd.s32 1, %s24
      %p30 = scmp.ge.s32.totalorder %s29, 1
      %s31 = scalar_select %p30, 0, %s29
      %s32 = sadd.s32 1, %s23
      %s33 = scalar_select %p30, %s32, %s23
      %p34 = scmp.ge.s32.totalorder %s33, 2
      %s35 = scalar_select %p34, 0, %s33
      %s36 = ssub.s32 %s23, %s35
      %s37 = ssub.s32 %s24, %s31
      %s38 = sor.u32 %s36, %s37
      %p39 = scmp.eq.s32.totalorder %s38, 0
      %s41 = sadd.s32 %s40, 1
      %s42 = scalar_select %p39, %s40, %s41
      %p45 = pneg %p39
      %p46 = scmp.eq.s32.totalorder %s16, 1
      %p47 = por %p45, %p46
      %p48 = scmp.ne.s32.totalorder %s40, %s43
      %p49 = scmp.eq.s32.totalorder %s16, 0
      %p50 = por %p48, %p49
      %p51 = scmp.ne.s32.totalorder %s40, %s43
      %p52 = scmp.eq.s32.totalorder %s21, 1
      %p53 = por %p51, %p52
      %p54 = scmp.ne.s32.totalorder %s43, %s44
      %p55 = scmp.eq.s32.totalorder %s21, 0
      %p56 = por %p54, %p55
      %p57 = scmp.ne.s32.totalorder %s43, %s44
      %p58 = scmp.eq.s32.totalorder %s22, 1
      %p59 = por %p57, %p58
      %p61 = scmp.ne.s32.totalorder %s44, %s60
      %p62 = scmp.eq.s32.totalorder %s22, 0
      %p63 = por %p61, %p62
      %s64 = ssub.s32 %s24, %s31
      %p65 = scmp.eq.s32.totalorder %s64, 0
      %s67 = sadd.s32 %s66, 1
      %s68 = scalar_select %p65, %s66, %s67
      %p71 = pneg %p65
      %p72 = scmp.eq.s32.totalorder %s16, 1
      %p73 = por %p71, %p72
      %p74 = scmp.ne.s32.totalorder %s66, %s69
      %p75 = scmp.eq.s32.totalorder %s16, 0
      %p76 = por %p74, %p75
      %p77 = scmp.ne.s32.totalorder %s66, %s69
      %p78 = scmp.eq.s32.totalorder %s21, 1
      %p79 = por %p77, %p78
      %p80 = scmp.ne.s32.totalorder %s69, %s70
      %p81 = scmp.eq.s32.totalorder %s21, 0
      %p82 = por %p80, %p81
      %p83 = scmp.ne.s32.totalorder %s69, %s70
      %p84 = scmp.eq.s32.totalorder %s22, 1
      %p85 = por %p83, %p84
      %p87 = scmp.ne.s32.totalorder %s70, %s86
      %p88 = scmp.eq.s32.totalorder %s22, 0
      %p89 = por %p87, %p88
      %s90 = ssub.s32 %s24, %s31
      %p91 = scmp.eq.s32.totalorder %s90, 0
      %s93 = sadd.s32 %s92, 1
      %s94 = scalar_select %p91, %s92, %s93
      %p97 = pneg %p91
      %p98 = scmp.eq.s32.totalorder %s16, 1
      %p99 = por %p97, %p98
      %p100 = scmp.ne.s32.totalorder %s92, %s95
      %p101 = scmp.eq.s32.totalorder %s16, 0
      %p102 = por %p100, %p101
      %p103 = scmp.ne.s32.totalorder %s92, %s95
      %p104 = scmp.eq.s32.totalorder %s21, 1
      %p105 = por %p103, %p104
      %p106 = scmp.ne.s32.totalorder %s95, %s96
      %p107 = scmp.eq.s32.totalorder %s21, 0
      %p108 = por %p106, %p107
      %p109 = scmp.ne.s32.totalorder %s95, %s96
      %p110 = scmp.eq.s32.totalorder %s22, 1
      %p111 = por %p109, %p110
      %p113 = scmp.ne.s32.totalorder %s96, %s112
      %p114 = scmp.eq.s32.totalorder %s22, 0
      %p115 = por %p113, %p114
      %s116 = ssub.s32 %s23, %s35
      %s117 = ssub.s32 %s24, %s31
      %s118 = sor.u32 %s116, %s117
      %p119 = scmp.eq.s32.totalorder %s118, 0
      %s121 = sadd.s32 %s120, 1
      %s122 = scalar_select %p119, %s120, %s121
      %p125 = pneg %p119
      %p126 = scmp.eq.s32.totalorder %s16, 1
      %p127 = por %p125, %p126
      %p128 = scmp.ne.s32.totalorder %s120, %s123
      %p129 = scmp.eq.s32.totalorder %s16, 0
      %p130 = por %p128, %p129
      %p131 = scmp.ne.s32.totalorder %s120, %s123
      %p132 = scmp.eq.s32.totalorder %s21, 1
      %p133 = por %p131, %p132
      %p134 = scmp.ne.s32.totalorder %s123, %s124
      %p135 = scmp.eq.s32.totalorder %s21, 0
      %p136 = por %p134, %p135
      %p137 = scmp.ne.s32.totalorder %s123, %s124
      %p138 = scmp.eq.s32.totalorder %s22, 1
      %p139 = por %p137, %p138
      %p141 = scmp.ne.s32.totalorder %s124, %s140
      %p142 = scmp.eq.s32.totalorder %s22, 0
      %p143 = por %p141, %p142
      %p144 = scmp.le.s32.totalorder 1, %s16
      %p145 = scmp.lt.s32.totalorder %s16, 3
      %p146 = pnand %p144, %p145
      %p147 = pneg %p146
      // Predicated region
      $region9: #{tpu_custom_call.1} parent=5 // pred_check
        _
      $region10: #{tpu_custom_call.1} parent=5 // pred_check_branch
        %149 = sbr.rel (%p146) target = $region12
      $region11: #{tpu_custom_call.1} parent=5 // pred_region
        %s150 = ssub.s32 %s16, 1
        // Predicated region
        $region13: #{tpu_custom_call.1} parent=11 // pred_check
          %p151 = pneg %p82
        $region14: #{tpu_custom_call.1} parent=11 // pred_check_branch
          %153 = sbr.rel (%p151) target = $region16
        $region15: #{tpu_custom_call.1} parent=11 // pred_region
          %155 = vsyncadd [#allocation7], 0
          %s156 = smul.addr %s26, 4
          %s157 = scalar_lea.hbm %s1, %s156
          %s158 = sshll.u32 %s157, 4
          %s159 = int_to_ptr.hbm [resolvable:$true] %s158
          %s160 = sshll.u32 [#allocation6], 4
          %s161 = int_to_ptr.vmem [resolvable:$true] %s160
          %166 = dma.hbm_to_vmem [thread:$0]  %s159, 192, %s161, [#allocation7], 64, 64, 4
        $region16: #{tpu_custom_call.1} parent=11 // pred_fallthru
          _
        // Predicated region
        $region17: #{tpu_custom_call.1} parent=11 // pred_check
          %p167 = pneg %p108
        $region18: #{tpu_custom_call.1} parent=11 // pred_check_branch
          %169 = sbr.rel (%p167) target = $region20
        $region19: #{tpu_custom_call.1} parent=11 // pred_region
          %p170 = scmp.lt.s32.totalorder %s26, 0
          %s171 = scalar_select %p170, %s26, 0
          %s172 = scalar_lea.vmem %s2, %s171
        $region20: #{tpu_custom_call.1} parent=11 // pred_fallthru
          _
      $region12: #{tpu_custom_call.1} parent=5 // pred_fallthru
        _
      %p173 = scmp.lt.s32.totalorder %s16, 2
      // Predicated region
      $region21: #{tpu_custom_call.1} parent=5 // pred_check
        %p174 = pneg %p173
      $region22: #{tpu_custom_call.1} parent=5 // pred_check_branch
        %176 = sbr.rel (%p174) target = $region24
      $region23: #{tpu_custom_call.1} parent=5 // pred_region
        // Predicated region
        $region25: #{tpu_custom_call.1} parent=23 // pred_check
          %p177 = pneg %p50
        $region26: #{tpu_custom_call.1} parent=23 // pred_check_branch
          %179 = sbr.rel (%p177) target = $region28
        $region27: #{tpu_custom_call.1} parent=23 // pred_region
          %s180 = sand.u32 %s40, 1
          %s181 = scalar_lea.sflag [#allocation4], %s180
          %s182 = sand.u32 %s40, 1
          %s183 = smul.addr %s182, 256
          %s184 = scalar_lea.vmem [#allocation3], %s183
          %186 = vsyncadd %s181, 0
          %s187 = smul.addr %s23, 32
          %s188 = sadd.s32 %s24, %s187
          %s189 = smul.addr %s188, 8
          %s190 = scalar_lea.hbm %s0, %s189
          %s191 = sshll.u32 %s190, 4
          %s192 = int_to_ptr.hbm [resolvable:$true] %s191
          %s193 = sshll.u32 %s184, 4
          %s194 = int_to_ptr.vmem [resolvable:$true] %s193
          %199 = dma.hbm_to_vmem [thread:$0]  %s192, 4096, %s194, %s181, 128, 128, 8
        $region28: #{tpu_custom_call.1} parent=23 // pred_fallthru
          _
      $region24: #{tpu_custom_call.1} parent=5 // pred_fallthru
        _
      %p200 = scmp.le.s32.totalorder 1, %s16
      %p201 = scmp.lt.s32.totalorder %s16, 3
      %p202 = pnand %p200, %p201
      %p203 = pneg %p202
      // Predicated region
      $region29: #{tpu_custom_call.1} parent=5 // pred_check
        _
      $region30: #{tpu_custom_call.1} parent=5 // pred_check_branch
        %205 = sbr.rel (%p202) target = $region32
      $region31: #{tpu_custom_call.1} parent=5 // pred_region
        %s206 = ssub.s32 %s16, 1
        %s207 = sand.u32 %s43, 1
        %s208 = scalar_lea.sflag [#allocation4], %s207
        %s209 = sand.u32 %s43, 1
        %s210 = smul.addr %s209, 256
        %s211 = scalar_lea.vmem [#allocation3], %s210
        // Predicated region
        $region33: #{tpu_custom_call.1} parent=31 // pred_check
          %p212 = pneg %p56
        $region34: #{tpu_custom_call.1} parent=31 // pred_check_branch
          %214 = sbr.rel (%p212) target = $region36
        $region35: #{tpu_custom_call.1} parent=31 // pred_region
          %216 = dma.done %s208, 4096
        $region36: #{tpu_custom_call.1} parent=31 // pred_fallthru
          _
        // Predicated region
        $region37: #{tpu_custom_call.1} parent=31 // pred_check
          %p217 = pneg %p82
        $region38: #{tpu_custom_call.1} parent=31 // pred_check_branch
          %219 = sbr.rel (%p217) target = $region40
        $region39: #{tpu_custom_call.1} parent=31 // pred_region
          %221 = dma.done [#allocation7], 192
        $region40: #{tpu_custom_call.1} parent=31 // pred_fallthru
          _
        %s222 = sand.u32 %s43, 1
        %s223 = scalar_lea.sflag [#allocation4], %s222
        %s224 = sand.u32 %s43, 1
        %s225 = smul.addr %s224, 256
        %s226 = scalar_lea.vmem [#allocation3], %s225
        %p227 = pneg %p56
        %p228 = pneg %p53
        %p229 = pneg %p82
        %p230 = pneg %p79
        %p231 = scmp.lt.s32.totalorder %s26, 0
        %s232 = scalar_select %p231, %s26, 0
        %s233 = scalar_lea.vmem %s2, %s232
        %p234 = pneg %p108
        %p235 = pneg %p105
        %p236 = pneg %p136
        %p237 = pneg %p133
        %s238 = sand.u32 %s123, 1
        %s239 = scalar_lea.sflag [#allocation5], %s238
        %s240 = sand.u32 %s123, 1
        %s241 = smul.addr %s240, 256
        %s242 = scalar_lea.vmem [#allocation8], %s241
        %p243 = scmp.lt.s32.totalorder %s26, 0
        %s244 = scalar_select %p243, %s26, 0
        %s245 = scalar_lea.vmem %s2, %s244
        %246 = vst [vmem:[#allocation2] sm:$0xff] 0.0
        %247 = vst [vmem:[#allocation2 + $0x8] sm:$0xff] 0.0
        %248 = vst [vmem:[#allocation2 + $0x10] sm:$0xff] 0.0
        %249 = vst [vmem:[#allocation2 + $0x18] sm:$0xff] 0.0
        %s250 = scalar_lea.vmem [#allocation2], 544
        %251 = vst [vmem:[%s250] sm:$0xff] 0.0
        %252 = vst [vmem:[%s250 + $0x8] sm:$0xff] 0.0
        %253 = vst [vmem:[%s250 + $0x10] sm:$0xff] 0.0
        %254 = vst [vmem:[%s250 + $0x18] sm:$0xff] 0.0
        %255 = vst [vmem:[#allocation2] sm:$0xff] 0.0
        %256 = vst [vmem:[#allocation2 + $0x20] sm:$0xff] 0.0
        %257 = vst [vmem:[#allocation2 + $0x40] sm:$0xff] 0.0
        %258 = vst [vmem:[#allocation2 + $0x60] sm:$0xff] 0.0
        %259 = vst [vmem:[#allocation2 + $0x80] sm:$0xff] 0.0
        %260 = vst [vmem:[#allocation2 + $0xa0] sm:$0xff] 0.0
        %261 = vst [vmem:[#allocation2 + $0xc0] sm:$0xff] 0.0
        %262 = vst [vmem:[#allocation2 + $0xe0] sm:$0xff] 0.0
        %263 = vst [vmem:[#allocation2 + $0x100] sm:$0xff] 0.0
        %264 = vst [vmem:[#allocation2 + $0x120] sm:$0xff] 0.0
        %265 = vst [vmem:[#allocation2 + $0x140] sm:$0xff] 0.0
        %266 = vst [vmem:[#allocation2 + $0x160] sm:$0xff] 0.0
        %267 = vst [vmem:[#allocation2 + $0x180] sm:$0xff] 0.0
        %268 = vst [vmem:[#allocation2 + $0x1a0] sm:$0xff] 0.0
        %269 = vst [vmem:[#allocation2 + $0x1c0] sm:$0xff] 0.0
        %270 = vst [vmem:[#allocation2 + $0x1e0] sm:$0xff] 0.0
        %271 = vst [vmem:[#allocation2 + $0x200] sm:$0xff] 0.0
        %272 = vst [vmem:[#allocation2 + $0x220] sm:$0xff] 0.0
        %273 = vst [vmem:[#allocation2 + $0x18] sm:$0xff] 0.0
        %274 = vst [vmem:[#allocation2 + $0x38] sm:$0xff] 0.0
        %275 = vst [vmem:[#allocation2 + $0x58] sm:$0xff] 0.0
        %276 = vst [vmem:[#allocation2 + $0x78] sm:$0xff] 0.0
        %277 = vst [vmem:[#allocation2 + $0x98] sm:$0xff] 0.0
        %278 = vst [vmem:[#allocation2 + $0xb8] sm:$0xff] 0.0
        %279 = vst [vmem:[#allocation2 + $0xd8] sm:$0xff] 0.0
        %280 = vst [vmem:[#allocation2 + $0xf8] sm:$0xff] 0.0
        %281 = vst [vmem:[#allocation2 + $0x118] sm:$0xff] 0.0
        %282 = vst [vmem:[#allocation2 + $0x138] sm:$0xff] 0.0
        %283 = vst [vmem:[#allocation2 + $0x158] sm:$0xff] 0.0
        %284 = vst [vmem:[#allocation2 + $0x178] sm:$0xff] 0.0
        %285 = vst [vmem:[#allocation2 + $0x198] sm:$0xff] 0.0
        %286 = vst [vmem:[#allocation2 + $0x1b8] sm:$0xff] 0.0
        %287 = vst [vmem:[#allocation2 + $0x1d8] sm:$0xff] 0.0
        %288 = vst [vmem:[#allocation2 + $0x1f8] sm:$0xff] 0.0
        %289 = vst [vmem:[#allocation2 + $0x218] sm:$0xff] 0.0
        %290 = vst [vmem:[#allocation2 + $0x238] sm:$0xff] 0.0
        %v291 = vld [vmem:[%s211] sm:$0xff]
        %v292 = vld [vmem:[%s211 + $0x8] sm:$0xff]
        %v293 = vld [vmem:[%s211 + $0x10] sm:$0xff]
        %v294 = vld [vmem:[%s211 + $0x18] sm:$0xff]
        %v295 = vld [vmem:[%s211 + $0x20] sm:$0xff]
        %v296 = vld [vmem:[%s211 + $0x28] sm:$0xff]
        %v297 = vld [vmem:[%s211 + $0x30] sm:$0xff]
        %v298 = vld [vmem:[%s211 + $0x38] sm:$0xff]
        %v299 = vld [vmem:[%s211 + $0x40] sm:$0xff]
        %v300 = vld [vmem:[%s211 + $0x48] sm:$0xff]
        %v301 = vld [vmem:[%s211 + $0x50] sm:$0xff]
        %v302 = vld [vmem:[%s211 + $0x58] sm:$0xff]
        %v303 = vld [vmem:[%s211 + $0x60] sm:$0xff]
        %v304 = vld [vmem:[%s211 + $0x68] sm:$0xff]
        %v305 = vld [vmem:[%s211 + $0x70] sm:$0xff]
        %v306 = vld [vmem:[%s211 + $0x78] sm:$0xff]
        %v307 = vld [vmem:[%s211 + $0x80] sm:$0xff]
        %v308 = vld [vmem:[%s211 + $0x88] sm:$0xff]
        %v309 = vld [vmem:[%s211 + $0x90] sm:$0xff]
        %v310 = vld [vmem:[%s211 + $0x98] sm:$0xff]
        %v311 = vld [vmem:[%s211 + $0xa0] sm:$0xff]
        %v312 = vld [vmem:[%s211 + $0xa8] sm:$0xff]
        %v313 = vld [vmem:[%s211 + $0xb0] sm:$0xff]
        %v314 = vld [vmem:[%s211 + $0xb8] sm:$0xff]
        %v315 = vld [vmem:[%s211 + $0xc0] sm:$0xff]
        %v316 = vld [vmem:[%s211 + $0xc8] sm:$0xff]
        %v317 = vld [vmem:[%s211 + $0xd0] sm:$0xff]
        %v318 = vld [vmem:[%s211 + $0xd8] sm:$0xff]
        %v319 = vld [vmem:[%s211 + $0xe0] sm:$0xff]
        %v320 = vld [vmem:[%s211 + $0xe8] sm:$0xff]
        %v321 = vld [vmem:[%s211 + $0xf0] sm:$0xff]
        %v322 = vld [vmem:[%s211 + $0xf8] sm:$0xff]
        %s323 = scalar_lea.vmem [#allocation2], 32
        %324 = vst [vmem:[%s323 + $0x8] sm:$0xff] %v291
        %325 = vst [vmem:[%s323 + $0x10] sm:$0xff] %v292
        %326 = vst [vmem:[%s323 + $0x28] sm:$0xff] %v293
        %327 = vst [vmem:[%s323 + $0x30] sm:$0xff] %v294
        %328 = vst [vmem:[%s323 + $0x48] sm:$0xff] %v295
        %329 = vst [vmem:[%s323 + $0x50] sm:$0xff] %v296
        %330 = vst [vmem:[%s323 + $0x68] sm:$0xff] %v297
        %331 = vst [vmem:[%s323 + $0x70] sm:$0xff] %v298
        %332 = vst [vmem:[%s323 + $0x88] sm:$0xff] %v299
        %333 = vst [vmem:[%s323 + $0x90] sm:$0xff] %v300
        %334 = vst [vmem:[%s323 + $0xa8] sm:$0xff] %v301
        %335 = vst [vmem:[%s323 + $0xb0] sm:$0xff] %v302
        %336 = vst [vmem:[%s323 + $0xc8] sm:$0xff] %v303
        %337 = vst [vmem:[%s323 + $0xd0] sm:$0xff] %v304
        %338 = vst [vmem:[%s323 + $0xe8] sm:$0xff] %v305
        %339 = vst [vmem:[%s323 + $0xf0] sm:$0xff] %v306
        %340 = vst [vmem:[%s323 + $0x108] sm:$0xff] %v307
        %341 = vst [vmem:[%s323 + $0x110] sm:$0xff] %v308
        %342 = vst [vmem:[%s323 + $0x128] sm:$0xff] %v309
        %343 = vst [vmem:[%s323 + $0x130] sm:$0xff] %v310
        %344 = vst [vmem:[%s323 + $0x148] sm:$0xff] %v311
        %345 = vst [vmem:[%s323 + $0x150] sm:$0xff] %v312
        %346 = vst [vmem:[%s323 + $0x168] sm:$0xff] %v313
        %347 = vst [vmem:[%s323 + $0x170] sm:$0xff] %v314
        %348 = vst [vmem:[%s323 + $0x188] sm:$0xff] %v315
        %349 = vst [vmem:[%s323 + $0x190] sm:$0xff] %v316
        %350 = vst [vmem:[%s323 + $0x1a8] sm:$0xff] %v317
        %351 = vst [vmem:[%s323 + $0x1b0] sm:$0xff] %v318
        %352 = vst [vmem:[%s323 + $0x1c8] sm:$0xff] %v319
        %353 = vst [vmem:[%s323 + $0x1d0] sm:$0xff] %v320
        %354 = vst [vmem:[%s323 + $0x1e8] sm:$0xff] %v321
        %355 = vst [vmem:[%s323 + $0x1f0] sm:$0xff] %v322
        %v356 = vld [vmem:[#allocation6] sm:$0x7]
        %v357 = vld [vmem:[#allocation6 + $0x4] sm:$0x7]
        %v358 = vld [vmem:[#allocation6 + $0x8] sm:$0x7]
        %v359 = vld [vmem:[%s245] sm:$0x1]
        %v360 = vld [vmem:[#allocation2 + $0x7] sm:$0xff]
        %v361 = vld [vmem:[#allocation2 + $0xf] sm:$0xff]
        %v362 = vld [vmem:[#allocation2 + $0x27] sm:$0xff]
        %v363 = vld [vmem:[#allocation2 + $0x2f] sm:$0xff]
        %v364 = vld [vmem:[#allocation2 + $0x47] sm:$0xff]
        %v365 = vld [vmem:[#allocation2 + $0x4f] sm:$0xff]
        %v366 = vld [vmem:[#allocation2 + $0x67] sm:$0xff]
        %v367 = vld [vmem:[#allocation2 + $0x6f] sm:$0xff]
        %v368 = vld [vmem:[#allocation2 + $0x87] sm:$0xff]
        %v369 = vld [vmem:[#allocation2 + $0x8f] sm:$0xff]
        %v370 = vld [vmem:[#allocation2 + $0xa7] sm:$0xff]
        %v371 = vld [vmem:[#allocation2 + $0xaf] sm:$0xff]
        %v372 = vld [vmem:[#allocation2 + $0xc7] sm:$0xff]
        %v373 = vld [vmem:[#allocation2 + $0xcf] sm:$0xff]
        %v374 = vld [vmem:[#allocation2 + $0xe7] sm:$0xff]
        %v375 = vld [vmem:[#allocation2 + $0xef] sm:$0xff]
        %v376 = vld [vmem:[#allocation2 + $0x107] sm:$0xff]
        %v377 = vld [vmem:[#allocation2 + $0x10f] sm:$0xff]
        %v378 = vld [vmem:[#allocation2 + $0x127] sm:$0xff]
        %v379 = vld [vmem:[#allocation2 + $0x12f] sm:$0xff]
        %v380 = vld [vmem:[#allocation2 + $0x147] sm:$0xff]
        %v381 = vld [vmem:[#allocation2 + $0x14f] sm:$0xff]
        %v382 = vld [vmem:[#allocation2 + $0x167] sm:$0xff]
        %v383 = vld [vmem:[#allocation2 + $0x16f] sm:$0xff]
        %v384 = vld [vmem:[#allocation2 + $0x187] sm:$0xff]
        %v385 = vld [vmem:[#allocation2 + $0x18f] sm:$0xff]
        %v386 = vld [vmem:[#allocation2 + $0x1a7] sm:$0xff]
        %v387 = vld [vmem:[#allocation2 + $0x1af] sm:$0xff]
        %v388 = vld [vmem:[#allocation2 + $0x1c7] sm:$0xff]
        %v389 = vld [vmem:[#allocation2 + $0x1cf] sm:$0xff]
        %v390 = vld [vmem:[#allocation2 + $0x1e7] sm:$0xff]
        %v391 = vld [vmem:[#allocation2 + $0x1ef] sm:$0xff]
        %v392 = vld [vmem:[#allocation2 + $0x207] sm:$0xff]
        %v393 = vld [vmem:[#allocation2 + $0x20f] sm:$0xff]
        %v394 = vld [vmem:[#allocation2 + $0x227] sm:$0xff]
        %v395 = vld [vmem:[#allocation2 + $0x22f] sm:$0xff]
        %v396 = vld [vmem:[#allocation2 + $0x8] sm:$0xff]
        %v397 = vld [vmem:[#allocation2 + $0x10] sm:$0xff]
        %v398 = vld [vmem:[#allocation2 + $0x28] sm:$0xff]
        %v399 = vld [vmem:[#allocation2 + $0x30] sm:$0xff]
        %v400 = vld [vmem:[#allocation2 + $0x48] sm:$0xff]
        %v401 = vld [vmem:[#allocation2 + $0x50] sm:$0xff]
        %v402 = vld [vmem:[#allocation2 + $0x68] sm:$0xff]
        %v403 = vld [vmem:[#allocation2 + $0x70] sm:$0xff]
        %v404 = vld [vmem:[#allocation2 + $0x88] sm:$0xff]
        %v405 = vld [vmem:[#allocation2 + $0x90] sm:$0xff]
        %v406 = vld [vmem:[#allocation2 + $0xa8] sm:$0xff]
        %v407 = vld [vmem:[#allocation2 + $0xb0] sm:$0xff]
        %v408 = vld [vmem:[#allocation2 + $0xc8] sm:$0xff]
        %v409 = vld [vmem:[#allocation2 + $0xd0] sm:$0xff]
        %v410 = vld [vmem:[#allocation2 + $0xe8] sm:$0xff]
        %v411 = vld [vmem:[#allocation2 + $0xf0] sm:$0xff]
        %v412 = vld [vmem:[#allocation2 + $0x108] sm:$0xff]
        %v413 = vld [vmem:[#allocation2 + $0x110] sm:$0xff]
        %v414 = vld [vmem:[#allocation2 + $0x128] sm:$0xff]
        %v415 = vld [vmem:[#allocation2 + $0x130] sm:$0xff]
        %v416 = vld [vmem:[#allocation2 + $0x148] sm:$0xff]
        %v417 = vld [vmem:[#allocation2 + $0x150] sm:$0xff]
        %v418 = vld [vmem:[#allocation2 + $0x168] sm:$0xff]
        %v419 = vld [vmem:[#allocation2 + $0x170] sm:$0xff]
        %v420 = vld [vmem:[#allocation2 + $0x188] sm:$0xff]
        %v421 = vld [vmem:[#allocation2 + $0x190] sm:$0xff]
        %v422 = vld [vmem:[#allocation2 + $0x1a8] sm:$0xff]
        %v423 = vld [vmem:[#allocation2 + $0x1b0] sm:$0xff]
        %v424 = vld [vmem:[#allocation2 + $0x1c8] sm:$0xff]
        %v425 = vld [vmem:[#allocation2 + $0x1d0] sm:$0xff]
        %v426 = vld [vmem:[#allocation2 + $0x1e8] sm:$0xff]
        %v427 = vld [vmem:[#allocation2 + $0x1f0] sm:$0xff]
        %v428 = vld [vmem:[#allocation2 + $0x208] sm:$0xff]
        %v429 = vld [vmem:[#allocation2 + $0x210] sm:$0xff]
        %v430 = vld [vmem:[#allocation2 + $0x228] sm:$0xff]
        %v431 = vld [vmem:[#allocation2 + $0x230] sm:$0xff]
        %v432 = vld [vmem:[#allocation2 + $0x9] sm:$0xff]
        %v433 = vld [vmem:[#allocation2 + $0x11] sm:$0xff]
        %v434 = vld [vmem:[#allocation2 + $0x29] sm:$0xff]
        %v435 = vld [vmem:[#allocation2 + $0x31] sm:$0xff]
        %v436 = vld [vmem:[#allocation2 + $0x49] sm:$0xff]
        %v437 = vld [vmem:[#allocation2 + $0x51] sm:$0xff]
        %v438 = vld [vmem:[#allocation2 + $0x69] sm:$0xff]
        %v439 = vld [vmem:[#allocation2 + $0x71] sm:$0xff]
        %v440 = vld [vmem:[#allocation2 + $0x89] sm:$0xff]
        %v441 = vld [vmem:[#allocation2 + $0x91] sm:$0xff]
        %v442 = vld [vmem:[#allocation2 + $0xa9] sm:$0xff]
        %v443 = vld [vmem:[#allocation2 + $0xb1] sm:$0xff]
        %v444 = vld [vmem:[#allocation2 + $0xc9] sm:$0xff]
        %v445 = vld [vmem:[#allocation2 + $0xd1] sm:$0xff]
        %v446 = vld [vmem:[#allocation2 + $0xe9] sm:$0xff]
        %v447 = vld [vmem:[#allocation2 + $0xf1] sm:$0xff]
        %v448 = vld [vmem:[#allocation2 + $0x109] sm:$0xff]
        %v449 = vld [vmem:[#allocation2 + $0x111] sm:$0xff]
        %v450 = vld [vmem:[#allocation2 + $0x129] sm:$0xff]
        %v451 = vld [vmem:[#allocation2 + $0x131] sm:$0xff]
        %v452 = vld [vmem:[#allocation2 + $0x149] sm:$0xff]
        %v453 = vld [vmem:[#allocation2 + $0x151] sm:$0xff]
        %v454 = vld [vmem:[#allocation2 + $0x169] sm:$0xff]
        %v455 = vld [vmem:[#allocation2 + $0x171] sm:$0xff]
        %v456 = vld [vmem:[#allocation2 + $0x189] sm:$0xff]
        %v457 = vld [vmem:[#allocation2 + $0x191] sm:$0xff]
        %v458 = vld [vmem:[#allocation2 + $0x1a9] sm:$0xff]
        %v459 = vld [vmem:[#allocation2 + $0x1b1] sm:$0xff]
        %v460 = vld [vmem:[#allocation2 + $0x1c9] sm:$0xff]
        %v461 = vld [vmem:[#allocation2 + $0x1d1] sm:$0xff]
        %v462 = vld [vmem:[#allocation2 + $0x1e9] sm:$0xff]
        %v463 = vld [vmem:[#allocation2 + $0x1f1] sm:$0xff]
        %v464 = vld [vmem:[#allocation2 + $0x209] sm:$0xff]
        %v465 = vld [vmem:[#allocation2 + $0x211] sm:$0xff]
        %v466 = vld [vmem:[#allocation2 + $0x229] sm:$0xff]
        %v467 = vld [vmem:[#allocation2 + $0x231] sm:$0xff]
        %v469 = vperm.slane %v359, 0
        %v471 = vperm.slane %v356, 0
        %v472 = vmul.f32 %v360, %v471
        %v473 = vmul.f32 %v361, %v471
        %v474 = vmul.f32 %v362, %v471
        %v475 = vmul.f32 %v363, %v471
        %v476 = vmul.f32 %v364, %v471
        %v477 = vmul.f32 %v365, %v471
        %v478 = vmul.f32 %v366, %v471
        %v479 = vmul.f32 %v367, %v471
        %v480 = vmul.f32 %v368, %v471
        %v481 = vmul.f32 %v369, %v471
        %v482 = vmul.f32 %v370, %v471
        %v483 = vmul.f32 %v371, %v471
        %v484 = vmul.f32 %v372, %v471
        %v485 = vmul.f32 %v373, %v471
        %v486 = vmul.f32 %v374, %v471
        %v487 = vmul.f32 %v375, %v471
        %v488 = vmul.f32 %v376, %v471
        %v489 = vmul.f32 %v377, %v471
        %v490 = vmul.f32 %v378, %v471
        %v491 = vmul.f32 %v379, %v471
        %v492 = vmul.f32 %v380, %v471
        %v493 = vmul.f32 %v381, %v471
        %v494 = vmul.f32 %v382, %v471
        %v495 = vmul.f32 %v383, %v471
        %v496 = vmul.f32 %v384, %v471
        %v497 = vmul.f32 %v385, %v471
        %v498 = vmul.f32 %v386, %v471
        %v499 = vmul.f32 %v387, %v471
        %v500 = vmul.f32 %v388, %v471
        %v501 = vmul.f32 %v389, %v471
        %v502 = vmul.f32 %v390, %v471
        %v503 = vmul.f32 %v391, %v471
        %v504 = vadd.f32 %v469, %v472
        %v505 = vadd.f32 %v469, %v473
        %v506 = vadd.f32 %v469, %v474
        %v507 = vadd.f32 %v469, %v475
        %v508 = vadd.f32 %v469, %v476
        %v509 = vadd.f32 %v469, %v477
        %v510 = vadd.f32 %v469, %v478
        %v511 = vadd.f32 %v469, %v479
        %v512 = vadd.f32 %v469, %v480
        %v513 = vadd.f32 %v469, %v481
        %v514 = vadd.f32 %v469, %v482
        %v515 = vadd.f32 %v469, %v483
        %v516 = vadd.f32 %v469, %v484
        %v517 = vadd.f32 %v469, %v485
        %v518 = vadd.f32 %v469, %v486
        %v519 = vadd.f32 %v469, %v487
        %v520 = vadd.f32 %v469, %v488
        %v521 = vadd.f32 %v469, %v489
        %v522 = vadd.f32 %v469, %v490
        %v523 = vadd.f32 %v469, %v491
        %v524 = vadd.f32 %v469, %v492
        %v525 = vadd.f32 %v469, %v493
        %v526 = vadd.f32 %v469, %v494
        %v527 = vadd.f32 %v469, %v495
        %v528 = vadd.f32 %v469, %v496
        %v529 = vadd.f32 %v469, %v497
        %v530 = vadd.f32 %v469, %v498
        %v531 = vadd.f32 %v469, %v499
        %v532 = vadd.f32 %v469, %v500
        %v533 = vadd.f32 %v469, %v501
        %v534 = vadd.f32 %v469, %v502
        %v535 = vadd.f32 %v469, %v503
        %v536 = vperm.slane %v356, 1
        %v537 = vmul.f32 %v396, %v536
        %v538 = vmul.f32 %v397, %v536
        %v539 = vmul.f32 %v398, %v536
        %v540 = vmul.f32 %v399, %v536
        %v541 = vmul.f32 %v400, %v536
        %v542 = vmul.f32 %v401, %v536
        %v543 = vmul.f32 %v402, %v536
        %v544 = vmul.f32 %v403, %v536
        %v545 = vmul.f32 %v404, %v536
        %v546 = vmul.f32 %v405, %v536
        %v547 = vmul.f32 %v406, %v536
        %v548 = vmul.f32 %v407, %v536
        %v549 = vmul.f32 %v408, %v536
        %v550 = vmul.f32 %v409, %v536
        %v551 = vmul.f32 %v410, %v536
        %v552 = vmul.f32 %v411, %v536
        %v553 = vmul.f32 %v412, %v536
        %v554 = vmul.f32 %v413, %v536
        %v555 = vmul.f32 %v414, %v536
        %v556 = vmul.f32 %v415, %v536
        %v557 = vmul.f32 %v416, %v536
        %v558 = vmul.f32 %v417, %v536
        %v559 = vmul.f32 %v418, %v536
        %v560 = vmul.f32 %v419, %v536
        %v561 = vmul.f32 %v420, %v536
        %v562 = vmul.f32 %v421, %v536
        %v563 = vmul.f32 %v422, %v536
        %v564 = vmul.f32 %v423, %v536
        %v565 = vmul.f32 %v424, %v536
        %v566 = vmul.f32 %v425, %v536
        %v567 = vmul.f32 %v426, %v536
        %v568 = vmul.f32 %v427, %v536
        %v569 = vadd.f32 %v504, %v537
        %v570 = vadd.f32 %v505, %v538
        %v571 = vadd.f32 %v506, %v539
        %v572 = vadd.f32 %v507, %v540
        %v573 = vadd.f32 %v508, %v541
        %v574 = vadd.f32 %v509, %v542
        %v575 = vadd.f32 %v510, %v543
        %v576 = vadd.f32 %v511, %v544
        %v577 = vadd.f32 %v512, %v545
        %v578 = vadd.f32 %v513, %v546
        %v579 = vadd.f32 %v514, %v547
        %v580 = vadd.f32 %v515, %v548
        %v581 = vadd.f32 %v516, %v549
        %v582 = vadd.f32 %v517, %v550
        %v583 = vadd.f32 %v518, %v551
        %v584 = vadd.f32 %v519, %v552
        %v585 = vadd.f32 %v520, %v553
        %v586 = vadd.f32 %v521, %v554
        %v587 = vadd.f32 %v522, %v555
        %v588 = vadd.f32 %v523, %v556
        %v589 = vadd.f32 %v524, %v557
        %v590 = vadd.f32 %v525, %v558
        %v591 = vadd.f32 %v526, %v559
        %v592 = vadd.f32 %v527, %v560
        %v593 = vadd.f32 %v528, %v561
        %v594 = vadd.f32 %v529, %v562
        %v595 = vadd.f32 %v530, %v563
        %v596 = vadd.f32 %v531, %v564
        %v597 = vadd.f32 %v532, %v565
        %v598 = vadd.f32 %v533, %v566
        %v599 = vadd.f32 %v534, %v567
        %v600 = vadd.f32 %v535, %v568
        %v601 = vperm.slane %v356, 2
        %v602 = vmul.f32 %v432, %v601
        %v603 = vmul.f32 %v433, %v601
        %v604 = vmul.f32 %v434, %v601
        %v605 = vmul.f32 %v435, %v601
        %v606 = vmul.f32 %v436, %v601
        %v607 = vmul.f32 %v437, %v601
        %v608 = vmul.f32 %v438, %v601
        %v609 = vmul.f32 %v439, %v601
        %v610 = vmul.f32 %v440, %v601
        %v611 = vmul.f32 %v441, %v601
        %v612 = vmul.f32 %v442, %v601
        %v613 = vmul.f32 %v443, %v601
        %v614 = vmul.f32 %v444, %v601
        %v615 = vmul.f32 %v445, %v601
        %v616 = vmul.f32 %v446, %v601
        %v617 = vmul.f32 %v447, %v601
        %v618 = vmul.f32 %v448, %v601
        %v619 = vmul.f32 %v449, %v601
        %v620 = vmul.f32 %v450, %v601
        %v621 = vmul.f32 %v451, %v601
        %v622 = vmul.f32 %v452, %v601
        %v623 = vmul.f32 %v453, %v601
        %v624 = vmul.f32 %v454, %v601
        %v625 = vmul.f32 %v455, %v601
        %v626 = vmul.f32 %v456, %v601
        %v627 = vmul.f32 %v457, %v601
        %v628 = vmul.f32 %v458, %v601
        %v629 = vmul.f32 %v459, %v601
        %v630 = vmul.f32 %v460, %v601
        %v631 = vmul.f32 %v461, %v601
        %v632 = vmul.f32 %v462, %v601
        %v633 = vmul.f32 %v463, %v601
        %v634 = vadd.f32 %v569, %v602
        %v635 = vadd.f32 %v570, %v603
        %v636 = vadd.f32 %v571, %v604
        %v637 = vadd.f32 %v572, %v605
        %v638 = vadd.f32 %v573, %v606
        %v639 = vadd.f32 %v574, %v607
        %v640 = vadd.f32 %v575, %v608
        %v641 = vadd.f32 %v576, %v609
        %v642 = vadd.f32 %v577, %v610
        %v643 = vadd.f32 %v578, %v611
        %v644 = vadd.f32 %v579, %v612
        %v645 = vadd.f32 %v580, %v613
        %v646 = vadd.f32 %v581, %v614
        %v647 = vadd.f32 %v582, %v615
        %v648 = vadd.f32 %v583, %v616
        %v649 = vadd.f32 %v584, %v617
        %v650 = vadd.f32 %v585, %v618
        %v651 = vadd.f32 %v586, %v619
        %v652 = vadd.f32 %v587, %v620
        %v653 = vadd.f32 %v588, %v621
        %v654 = vadd.f32 %v589, %v622
        %v655 = vadd.f32 %v590, %v623
        %v656 = vadd.f32 %v591, %v624
        %v657 = vadd.f32 %v592, %v625
        %v658 = vadd.f32 %v593, %v626
        %v659 = vadd.f32 %v594, %v627
        %v660 = vadd.f32 %v595, %v628
        %v661 = vadd.f32 %v596, %v629
        %v662 = vadd.f32 %v597, %v630
        %v663 = vadd.f32 %v598, %v631
        %v664 = vadd.f32 %v599, %v632
        %v665 = vadd.f32 %v600, %v633
        %v666 = vperm.slane %v357, 0
        %v667 = vmul.f32 %v362, %v666
        %v668 = vmul.f32 %v363, %v666
        %v669 = vmul.f32 %v364, %v666
        %v670 = vmul.f32 %v365, %v666
        %v671 = vmul.f32 %v366, %v666
        %v672 = vmul.f32 %v367, %v666
        %v673 = vmul.f32 %v368, %v666
        %v674 = vmul.f32 %v369, %v666
        %v675 = vmul.f32 %v370, %v666
        %v676 = vmul.f32 %v371, %v666
        %v677 = vmul.f32 %v372, %v666
        %v678 = vmul.f32 %v373, %v666
        %v679 = vmul.f32 %v374, %v666
        %v680 = vmul.f32 %v375, %v666
        %v681 = vmul.f32 %v376, %v666
        %v682 = vmul.f32 %v377, %v666
        %v683 = vmul.f32 %v378, %v666
        %v684 = vmul.f32 %v379, %v666
        %v685 = vmul.f32 %v380, %v666
        %v686 = vmul.f32 %v381, %v666
        %v687 = vmul.f32 %v382, %v666
        %v688 = vmul.f32 %v383, %v666
        %v689 = vmul.f32 %v384, %v666
        %v690 = vmul.f32 %v385, %v666
        %v691 = vmul.f32 %v386, %v666
        %v692 = vmul.f32 %v387, %v666
        %v693 = vmul.f32 %v388, %v666
        %v694 = vmul.f32 %v389, %v666
        %v695 = vmul.f32 %v390, %v666
        %v696 = vmul.f32 %v391, %v666
        %v697 = vmul.f32 %v392, %v666
        %v698 = vmul.f32 %v393, %v666
        %v699 = vadd.f32 %v634, %v667
        %v700 = vadd.f32 %v635, %v668
        %v701 = vadd.f32 %v636, %v669
        %v702 = vadd.f32 %v637, %v670
        %v703 = vadd.f32 %v638, %v671
        %v704 = vadd.f32 %v639, %v672
        %v705 = vadd.f32 %v640, %v673
        %v706 = vadd.f32 %v641, %v674
        %v707 = vadd.f32 %v642, %v675
        %v708 = vadd.f32 %v643, %v676
        %v709 = vadd.f32 %v644, %v677
        %v710 = vadd.f32 %v645, %v678
        %v711 = vadd.f32 %v646, %v679
        %v712 = vadd.f32 %v647, %v680
        %v713 = vadd.f32 %v648, %v681
        %v714 = vadd.f32 %v649, %v682
        %v715 = vadd.f32 %v650, %v683
        %v716 = vadd.f32 %v651, %v684
        %v717 = vadd.f32 %v652, %v685
        %v718 = vadd.f32 %v653, %v686
        %v719 = vadd.f32 %v654, %v687
        %v720 = vadd.f32 %v655, %v688
        %v721 = vadd.f32 %v656, %v689
        %v722 = vadd.f32 %v657, %v690
        %v723 = vadd.f32 %v658, %v691
        %v724 = vadd.f32 %v659, %v692
        %v725 = vadd.f32 %v660, %v693
        %v726 = vadd.f32 %v661, %v694
        %v727 = vadd.f32 %v662, %v695
        %v728 = vadd.f32 %v663, %v696
        %v729 = vadd.f32 %v664, %v697
        %v730 = vadd.f32 %v665, %v698
        %v731 = vperm.slane %v357, 1
        %v732 = vmul.f32 %v398, %v731
        %v733 = vmul.f32 %v399, %v731
        %v734 = vmul.f32 %v400, %v731
        %v735 = vmul.f32 %v401, %v731
        %v736 = vmul.f32 %v402, %v731
        %v737 = vmul.f32 %v403, %v731
        %v738 = vmul.f32 %v404, %v731
        %v739 = vmul.f32 %v405, %v731
        %v740 = vmul.f32 %v406, %v731
        %v741 = vmul.f32 %v407, %v731
        %v742 = vmul.f32 %v408, %v731
        %v743 = vmul.f32 %v409, %v731
        %v744 = vmul.f32 %v410, %v731
        %v745 = vmul.f32 %v411, %v731
        %v746 = vmul.f32 %v412, %v731
        %v747 = vmul.f32 %v413, %v731
        %v748 = vmul.f32 %v414, %v731
        %v749 = vmul.f32 %v415, %v731
        %v750 = vmul.f32 %v416, %v731
        %v751 = vmul.f32 %v417, %v731
        %v752 = vmul.f32 %v418, %v731
        %v753 = vmul.f32 %v419, %v731
        %v754 = vmul.f32 %v420, %v731
        %v755 = vmul.f32 %v421, %v731
        %v756 = vmul.f32 %v422, %v731
        %v757 = vmul.f32 %v423, %v731
        %v758 = vmul.f32 %v424, %v731
        %v759 = vmul.f32 %v425, %v731
        %v760 = vmul.f32 %v426, %v731
        %v761 = vmul.f32 %v427, %v731
        %v762 = vmul.f32 %v428, %v731
        %v763 = vmul.f32 %v429, %v731
        %v764 = vadd.f32 %v699, %v732
        %v765 = vadd.f32 %v700, %v733
        %v766 = vadd.f32 %v701, %v734
        %v767 = vadd.f32 %v702, %v735
        %v768 = vadd.f32 %v703, %v736
        %v769 = vadd.f32 %v704, %v737
        %v770 = vadd.f32 %v705, %v738
        %v771 = vadd.f32 %v706, %v739
        %v772 = vadd.f32 %v707, %v740
        %v773 = vadd.f32 %v708, %v741
        %v774 = vadd.f32 %v709, %v742
        %v775 = vadd.f32 %v710, %v743
        %v776 = vadd.f32 %v711, %v744
        %v777 = vadd.f32 %v712, %v745
        %v778 = vadd.f32 %v713, %v746
        %v779 = vadd.f32 %v714, %v747
        %v780 = vadd.f32 %v715, %v748
        %v781 = vadd.f32 %v716, %v749
        %v782 = vadd.f32 %v717, %v750
        %v783 = vadd.f32 %v718, %v751
        %v784 = vadd.f32 %v719, %v752
        %v785 = vadd.f32 %v720, %v753
        %v786 = vadd.f32 %v721, %v754
        %v787 = vadd.f32 %v722, %v755
        %v788 = vadd.f32 %v723, %v756
        %v789 = vadd.f32 %v724, %v757
        %v790 = vadd.f32 %v725, %v758
        %v791 = vadd.f32 %v726, %v759
        %v792 = vadd.f32 %v727, %v760
        %v793 = vadd.f32 %v728, %v761
        %v794 = vadd.f32 %v729, %v762
        %v795 = vadd.f32 %v730, %v763
        %v796 = vperm.slane %v357, 2
        %v797 = vmul.f32 %v434, %v796
        %v798 = vmul.f32 %v435, %v796
        %v799 = vmul.f32 %v436, %v796
        %v800 = vmul.f32 %v437, %v796
        %v801 = vmul.f32 %v438, %v796
        %v802 = vmul.f32 %v439, %v796
        %v803 = vmul.f32 %v440, %v796
        %v804 = vmul.f32 %v441, %v796
        %v805 = vmul.f32 %v442, %v796
        %v806 = vmul.f32 %v443, %v796
        %v807 = vmul.f32 %v444, %v796
        %v808 = vmul.f32 %v445, %v796
        %v809 = vmul.f32 %v446, %v796
        %v810 = vmul.f32 %v447, %v796
        %v811 = vmul.f32 %v448, %v796
        %v812 = vmul.f32 %v449, %v796
        %v813 = vmul.f32 %v450, %v796
        %v814 = vmul.f32 %v451, %v796
        %v815 = vmul.f32 %v452, %v796
        %v816 = vmul.f32 %v453, %v796
        %v817 = vmul.f32 %v454, %v796
        %v818 = vmul.f32 %v455, %v796
        %v819 = vmul.f32 %v456, %v796
        %v820 = vmul.f32 %v457, %v796
        %v821 = vmul.f32 %v458, %v796
        %v822 = vmul.f32 %v459, %v796
        %v823 = vmul.f32 %v460, %v796
        %v824 = vmul.f32 %v461, %v796
        %v825 = vmul.f32 %v462, %v796
        %v826 = vmul.f32 %v463, %v796
        %v827 = vmul.f32 %v464, %v796
        %v828 = vmul.f32 %v465, %v796
        %v829 = vadd.f32 %v764, %v797
        %v830 = vadd.f32 %v765, %v798
        %v831 = vadd.f32 %v766, %v799
        %v832 = vadd.f32 %v767, %v800
        %v833 = vadd.f32 %v768, %v801
        %v834 = vadd.f32 %v769, %v802
        %v835 = vadd.f32 %v770, %v803
        %v836 = vadd.f32 %v771, %v804
        %v837 = vadd.f32 %v772, %v805
        %v838 = vadd.f32 %v773, %v806
        %v839 = vadd.f32 %v774, %v807
        %v840 = vadd.f32 %v775, %v808
        %v841 = vadd.f32 %v776, %v809
        %v842 = vadd.f32 %v777, %v810
        %v843 = vadd.f32 %v778, %v811
        %v844 = vadd.f32 %v779, %v812
        %v845 = vadd.f32 %v780, %v813
        %v846 = vadd.f32 %v781, %v814
        %v847 = vadd.f32 %v782, %v815
        %v848 = vadd.f32 %v783, %v816
        %v849 = vadd.f32 %v784, %v817
        %v850 = vadd.f32 %v785, %v818
        %v851 = vadd.f32 %v786, %v819
        %v852 = vadd.f32 %v787, %v820
        %v853 = vadd.f32 %v788, %v821
        %v854 = vadd.f32 %v789, %v822
        %v855 = vadd.f32 %v790, %v823
        %v856 = vadd.f32 %v791, %v824
        %v857 = vadd.f32 %v792, %v825
        %v858 = vadd.f32 %v793, %v826
        %v859 = vadd.f32 %v794, %v827
        %v860 = vadd.f32 %v795, %v828
        %v861 = vperm.slane %v358, 0
        %v862 = vmul.f32 %v364, %v861
        %v863 = vmul.f32 %v365, %v861
        %v864 = vmul.f32 %v366, %v861
        %v865 = vmul.f32 %v367, %v861
        %v866 = vmul.f32 %v368, %v861
        %v867 = vmul.f32 %v369, %v861
        %v868 = vmul.f32 %v370, %v861
        %v869 = vmul.f32 %v371, %v861
        %v870 = vmul.f32 %v372, %v861
        %v871 = vmul.f32 %v373, %v861
        %v872 = vmul.f32 %v374, %v861
        %v873 = vmul.f32 %v375, %v861
        %v874 = vmul.f32 %v376, %v861
        %v875 = vmul.f32 %v377, %v861
        %v876 = vmul.f32 %v378, %v861
        %v877 = vmul.f32 %v379, %v861
        %v878 = vmul.f32 %v380, %v861
        %v879 = vmul.f32 %v381, %v861
        %v880 = vmul.f32 %v382, %v861
        %v881 = vmul.f32 %v383, %v861
        %v882 = vmul.f32 %v384, %v861
        %v883 = vmul.f32 %v385, %v861
        %v884 = vmul.f32 %v386, %v861
        %v885 = vmul.f32 %v387, %v861
        %v886 = vmul.f32 %v388, %v861
        %v887 = vmul.f32 %v389, %v861
        %v888 = vmul.f32 %v390, %v861
        %v889 = vmul.f32 %v391, %v861
        %v890 = vmul.f32 %v392, %v861
        %v891 = vmul.f32 %v393, %v861
        %v892 = vmul.f32 %v394, %v861
        %v893 = vmul.f32 %v395, %v861
        %v894 = vadd.f32 %v829, %v862
        %v895 = vadd.f32 %v830, %v863
        %v896 = vadd.f32 %v831, %v864
        %v897 = vadd.f32 %v832, %v865
        %v898 = vadd.f32 %v833, %v866
        %v899 = vadd.f32 %v834, %v867
        %v900 = vadd.f32 %v835, %v868
        %v901 = vadd.f32 %v836, %v869
        %v902 = vadd.f32 %v837, %v870
        %v903 = vadd.f32 %v838, %v871
        %v904 = vadd.f32 %v839, %v872
        %v905 = vadd.f32 %v840, %v873
        %v906 = vadd.f32 %v841, %v874
        %v907 = vadd.f32 %v842, %v875
        %v908 = vadd.f32 %v843, %v876
        %v909 = vadd.f32 %v844, %v877
        %v910 = vadd.f32 %v845, %v878
        %v911 = vadd.f32 %v846, %v879
        %v912 = vadd.f32 %v847, %v880
        %v913 = vadd.f32 %v848, %v881
        %v914 = vadd.f32 %v849, %v882
        %v915 = vadd.f32 %v850, %v883
        %v916 = vadd.f32 %v851, %v884
        %v917 = vadd.f32 %v852, %v885
        %v918 = vadd.f32 %v853, %v886
        %v919 = vadd.f32 %v854, %v887
        %v920 = vadd.f32 %v855, %v888
        %v921 = vadd.f32 %v856, %v889
        %v922 = vadd.f32 %v857, %v890
        %v923 = vadd.f32 %v858, %v891
        %v924 = vadd.f32 %v859, %v892
        %v925 = vadd.f32 %v860, %v893
        %v926 = vperm.slane %v358, 1
        %v927 = vmul.f32 %v400, %v926
        %v928 = vmul.f32 %v401, %v926
        %v929 = vmul.f32 %v402, %v926
        %v930 = vmul.f32 %v403, %v926
        %v931 = vmul.f32 %v404, %v926
        %v932 = vmul.f32 %v405, %v926
        %v933 = vmul.f32 %v406, %v926
        %v934 = vmul.f32 %v407, %v926
        %v935 = vmul.f32 %v408, %v926
        %v936 = vmul.f32 %v409, %v926
        %v937 = vmul.f32 %v410, %v926
        %v938 = vmul.f32 %v411, %v926
        %v939 = vmul.f32 %v412, %v926
        %v940 = vmul.f32 %v413, %v926
        %v941 = vmul.f32 %v414, %v926
        %v942 = vmul.f32 %v415, %v926
        %v943 = vmul.f32 %v416, %v926
        %v944 = vmul.f32 %v417, %v926
        %v945 = vmul.f32 %v418, %v926
        %v946 = vmul.f32 %v419, %v926
        %v947 = vmul.f32 %v420, %v926
        %v948 = vmul.f32 %v421, %v926
        %v949 = vmul.f32 %v422, %v926
        %v950 = vmul.f32 %v423, %v926
        %v951 = vmul.f32 %v424, %v926
        %v952 = vmul.f32 %v425, %v926
        %v953 = vmul.f32 %v426, %v926
        %v954 = vmul.f32 %v427, %v926
        %v955 = vmul.f32 %v428, %v926
        %v956 = vmul.f32 %v429, %v926
        %v957 = vmul.f32 %v430, %v926
        %v958 = vmul.f32 %v431, %v926
        %v959 = vadd.f32 %v894, %v927
        %v960 = vadd.f32 %v895, %v928
        %v961 = vadd.f32 %v896, %v929
        %v962 = vadd.f32 %v897, %v930
        %v963 = vadd.f32 %v898, %v931
        %v964 = vadd.f32 %v899, %v932
        %v965 = vadd.f32 %v900, %v933
        %v966 = vadd.f32 %v901, %v934
        %v967 = vadd.f32 %v902, %v935
        %v968 = vadd.f32 %v903, %v936
        %v969 = vadd.f32 %v904, %v937
        %v970 = vadd.f32 %v905, %v938
        %v971 = vadd.f32 %v906, %v939
        %v972 = vadd.f32 %v907, %v940
        %v973 = vadd.f32 %v908, %v941
        %v974 = vadd.f32 %v909, %v942
        %v975 = vadd.f32 %v910, %v943
        %v976 = vadd.f32 %v911, %v944
        %v977 = vadd.f32 %v912, %v945
        %v978 = vadd.f32 %v913, %v946
        %v979 = vadd.f32 %v914, %v947
        %v980 = vadd.f32 %v915, %v948
        %v981 = vadd.f32 %v916, %v949
        %v982 = vadd.f32 %v917, %v950
        %v983 = vadd.f32 %v918, %v951
        %v984 = vadd.f32 %v919, %v952
        %v985 = vadd.f32 %v920, %v953
        %v986 = vadd.f32 %v921, %v954
        %v987 = vadd.f32 %v922, %v955
        %v988 = vadd.f32 %v923, %v956
        %v989 = vadd.f32 %v924, %v957
        %v990 = vadd.f32 %v925, %v958
        %v991 = vperm.slane %v358, 2
        %v992 = vmul.f32 %v436, %v991
        %v993 = vmul.f32 %v437, %v991
        %v994 = vmul.f32 %v438, %v991
        %v995 = vmul.f32 %v439, %v991
        %v996 = vmul.f32 %v440, %v991
        %v997 = vmul.f32 %v441, %v991
        %v998 = vmul.f32 %v442, %v991
        %v999 = vmul.f32 %v443, %v991
        %v1000 = vmul.f32 %v444, %v991
        %v1001 = vmul.f32 %v445, %v991
        %v1002 = vmul.f32 %v446, %v991
        %v1003 = vmul.f32 %v447, %v991
        %v1004 = vmul.f32 %v448, %v991
        %v1005 = vmul.f32 %v449, %v991
        %v1006 = vmul.f32 %v450, %v991
        %v1007 = vmul.f32 %v451, %v991
        %v1008 = vmul.f32 %v452, %v991
        %v1009 = vmul.f32 %v453, %v991
        %v1010 = vmul.f32 %v454, %v991
        %v1011 = vmul.f32 %v455, %v991
        %v1012 = vmul.f32 %v456, %v991
        %v1013 = vmul.f32 %v457, %v991
        %v1014 = vmul.f32 %v458, %v991
        %v1015 = vmul.f32 %v459, %v991
        %v1016 = vmul.f32 %v460, %v991
        %v1017 = vmul.f32 %v461, %v991
        %v1018 = vmul.f32 %v462, %v991
        %v1019 = vmul.f32 %v463, %v991
        %v1020 = vmul.f32 %v464, %v991
        %v1021 = vmul.f32 %v465, %v991
        %v1022 = vmul.f32 %v466, %v991
        %v1023 = vmul.f32 %v467, %v991
        %v1024 = vadd.f32 %v959, %v992
        %v1025 = vadd.f32 %v960, %v993
        %v1026 = vadd.f32 %v961, %v994
        %v1027 = vadd.f32 %v962, %v995
        %v1028 = vadd.f32 %v963, %v996
        %v1029 = vadd.f32 %v964, %v997
        %v1030 = vadd.f32 %v965, %v998
        %v1031 = vadd.f32 %v966, %v999
        %v1032 = vadd.f32 %v967, %v1000
        %v1033 = vadd.f32 %v968, %v1001
        %v1034 = vadd.f32 %v969, %v1002
        %v1035 = vadd.f32 %v970, %v1003
        %v1036 = vadd.f32 %v971, %v1004
        %v1037 = vadd.f32 %v972, %v1005
        %v1038 = vadd.f32 %v973, %v1006
        %v1039 = vadd.f32 %v974, %v1007
        %v1040 = vadd.f32 %v975, %v1008
        %v1041 = vadd.f32 %v976, %v1009
        %v1042 = vadd.f32 %v977, %v1010
        %v1043 = vadd.f32 %v978, %v1011
        %v1044 = vadd.f32 %v979, %v1012
        %v1045 = vadd.f32 %v980, %v1013
        %v1046 = vadd.f32 %v981, %v1014
        %v1047 = vadd.f32 %v982, %v1015
        %v1048 = vadd.f32 %v983, %v1016
        %v1049 = vadd.f32 %v984, %v1017
        %v1050 = vadd.f32 %v985, %v1018
        %v1051 = vadd.f32 %v986, %v1019
        %v1052 = vadd.f32 %v987, %v1020
        %v1053 = vadd.f32 %v988, %v1021
        %v1054 = vadd.f32 %v989, %v1022
        %v1055 = vadd.f32 %v990, %v1023
        %1056 = vst [vmem:[%s242] sm:$0xff] %v1024
        %1057 = vst [vmem:[%s242 + $0x8] sm:$0xff] %v1025
        %1058 = vst [vmem:[%s242 + $0x10] sm:$0xff] %v1026
        %1059 = vst [vmem:[%s242 + $0x18] sm:$0xff] %v1027
        %1060 = vst [vmem:[%s242 + $0x20] sm:$0xff] %v1028
        %1061 = vst [vmem:[%s242 + $0x28] sm:$0xff] %v1029
        %1062 = vst [vmem:[%s242 + $0x30] sm:$0xff] %v1030
        %1063 = vst [vmem:[%s242 + $0x38] sm:$0xff] %v1031
        %1064 = vst [vmem:[%s242 + $0x40] sm:$0xff] %v1032
        %1065 = vst [vmem:[%s242 + $0x48] sm:$0xff] %v1033
        %1066 = vst [vmem:[%s242 + $0x50] sm:$0xff] %v1034
        %1067 = vst [vmem:[%s242 + $0x58] sm:$0xff] %v1035
        %1068 = vst [vmem:[%s242 + $0x60] sm:$0xff] %v1036
        %1069 = vst [vmem:[%s242 + $0x68] sm:$0xff] %v1037
        %1070 = vst [vmem:[%s242 + $0x70] sm:$0xff] %v1038
        %1071 = vst [vmem:[%s242 + $0x78] sm:$0xff] %v1039
        %1072 = vst [vmem:[%s242 + $0x80] sm:$0xff] %v1040
        %1073 = vst [vmem:[%s242 + $0x88] sm:$0xff] %v1041
        %1074 = vst [vmem:[%s242 + $0x90] sm:$0xff] %v1042
        %1075 = vst [vmem:[%s242 + $0x98] sm:$0xff] %v1043
        %1076 = vst [vmem:[%s242 + $0xa0] sm:$0xff] %v1044
        %1077 = vst [vmem:[%s242 + $0xa8] sm:$0xff] %v1045
        %1078 = vst [vmem:[%s242 + $0xb0] sm:$0xff] %v1046
        %1079 = vst [vmem:[%s242 + $0xb8] sm:$0xff] %v1047
        %1080 = vst [vmem:[%s242 + $0xc0] sm:$0xff] %v1048
        %1081 = vst [vmem:[%s242 + $0xc8] sm:$0xff] %v1049
        %1082 = vst [vmem:[%s242 + $0xd0] sm:$0xff] %v1050
        %1083 = vst [vmem:[%s242 + $0xd8] sm:$0xff] %v1051
        %1084 = vst [vmem:[%s242 + $0xe0] sm:$0xff] %v1052
        %1085 = vst [vmem:[%s242 + $0xe8] sm:$0xff] %v1053
        %1086 = vst [vmem:[%s242 + $0xf0] sm:$0xff] %v1054
        %1087 = vst [vmem:[%s242 + $0xf8] sm:$0xff] %v1055
        %s1088 = sand.u32 %s123, 1
        %s1089 = scalar_lea.sflag [#allocation5], %s1088
        %s1090 = sand.u32 %s123, 1
        %s1091 = smul.addr %s1090, 256
        %s1092 = scalar_lea.vmem [#allocation8], %s1091
        // Predicated region
        $region41: #{tpu_custom_call.1} parent=31 // pred_check
          %p1093 = pneg %p133
        $region42: #{tpu_custom_call.1} parent=31 // pred_check_branch
          %1095 = sbr.rel (%p1093) target = $region44
        $region43: #{tpu_custom_call.1} parent=31 // pred_region
          %1097 = vsyncadd %s1089, 0
          %s1098 = smul.addr %s25, 32
          %s1099 = sadd.s32 %s26, %s1098
          %s1100 = smul.addr %s1099, 8
          %s1101 = scalar_lea.hbm %s3, %s1100
          %s1102 = sshll.u32 %s1092, 4
          %s1103 = int_to_ptr.vmem [resolvable:$true] %s1102
          %s1104 = sshll.u32 %s1101, 4
          %s1105 = int_to_ptr.hbm [resolvable:$true] %s1104
          %1110 = dma.vmem_to_hbm [thread:$0]  %s1103, 4096, %s1105, %s1089, 128, 128, 8
        $region44: #{tpu_custom_call.1} parent=31 // pred_fallthru
          _
      $region32: #{tpu_custom_call.1} parent=5 // pred_fallthru
        _
      %p1111 = scmp.le.s32.totalorder 2, %s16
      // Predicated region
      $region45: #{tpu_custom_call.1} parent=5 // pred_check
        %p1112 = pneg %p1111
      $region46: #{tpu_custom_call.1} parent=5 // pred_check_branch
        %1114 = sbr.rel (%p1112) target = $region48
      $region47: #{tpu_custom_call.1} parent=5 // pred_region
        %s1115 = ssub.s32 %s16, 2
        // Predicated region
        $region49: #{tpu_custom_call.1} parent=47 // pred_check
          %p1116 = pneg %p139
        $region50: #{tpu_custom_call.1} parent=47 // pred_check_branch
          %1118 = sbr.rel (%p1116) target = $region52
        $region51: #{tpu_custom_call.1} parent=47 // pred_region
          %s1119 = sand.u32 %s124, 1
          %s1120 = scalar_lea.sflag [#allocation5], %s1119
          %s1121 = sand.u32 %s124, 1
          %s1122 = smul.addr %s1121, 256
          %s1123 = scalar_lea.vmem [#allocation8], %s1122
          %1125 = dma.done %s1120, 4096
        $region52: #{tpu_custom_call.1} parent=47 // pred_fallthru
          _
      $region48: #{tpu_custom_call.1} parent=5 // pred_fallthru
        _
    $region6: #{tpu_custom_call.1} parent=1 // loop_footer
      %s20 = sadd.s32 1, %s16
    $region7: #{tpu_custom_call.1} parent=1 // loop_footer_branch
      %15 = sbr.rel target = $region3
    $region8: #{tpu_custom_call.1} parent=1 // loop_exit
      _
    %1126 = vsyncpa [#allocation4], 1
    %s1127 = scalar_lea.sflag [#allocation4], 1
    %1128 = vsyncpa %s1127, 1
    %1129 = vsyncpa [#allocation7], 1
    %1130 = vsyncpa [#allocation5], 1
    %s1131 = scalar_lea.sflag [#allocation5], 1
    %1132 = vsyncpa %s1131, 1

</llo_original>
